<compile_context>
chip_gen: v7x
topology: tpu7x:2x2x1
jax: 0.10.0
libtpu: 0.0.40
codegen_flags: <defaults>
</compile_context>

<pallas_src>
import functools

import jax
import jax.numpy as jnp
from jax import lax
from jax.experimental import pallas as pl
from jax.experimental.pallas import tpu as pltpu


def _ibn_kernel(x_ref, is_in_ref, bn_scale_ref, bn_shift_ref,
                in_w_ref, in_b_ref, o_ref, *, in_eps):
    # x_ref / o_ref : (Rt, HW) tile of the flattened activation.
    # param refs    : (Rt, 1) f32 per-row values in VMEM.
    x = x_ref[...].astype(jnp.float32)                    # f32 math for bf16/fp16 inputs
    inv_hw = 1.0 / x.shape[-1]

    # Instance statistics per row (biased variance, like InstanceNorm2d).
    mean = jnp.sum(x, axis=-1, keepdims=True) * inv_hw    # (Rt, 1)
    xc = x - mean
    var = jnp.sum(xc * xc, axis=-1, keepdims=True) * inv_hw

    in_scale = in_w_ref[...] * lax.rsqrt(var + in_eps)    # EUP rsqrt
    in_shift = in_b_ref[...] - mean * in_scale

    use_in = is_in_ref[...] > 0.5
    scale = jnp.where(use_in, in_scale, bn_scale_ref[...])
    shift = jnp.where(use_in, in_shift, bn_shift_ref[...])

    # Single fused multiply-add per element, explicit downcast on store.
    o_ref[...] = (x * scale + shift).astype(o_ref.dtype)


def ibn_forward(x, in_weight, in_bias,
                bn_weight, bn_bias, bn_running_mean, bn_running_var,
                *, half=None, in_eps=1e-5, bn_eps=1e-5):
    """IBN forward. x: (N, C, H, W); IN params: (half,); BN params: (C-half,)."""
    N, C, H, W = x.shape
    if half is None:
        half = C // 2
    HW = H * W
    NC = N * C
    f32 = jnp.float32

    # ---- parameter setup (glue, tiny arrays) --------------------------------
    # BN half folded to per-channel affine: scale = w * rsqrt(var + eps),
    # shift = b - mean * scale (F.batch_norm(..., training=False) semantics).
    bn_scale_c = bn_weight.astype(f32) * lax.rsqrt(bn_running_var.astype(f32) + bn_eps)
    bn_shift_c = bn_bias.astype(f32) - bn_running_mean.astype(f32) * bn_scale_c

    zeros_in = jnp.zeros((half,), f32)
    zeros_bn = jnp.zeros((C - half,), f32)
    is_in_c = jnp.concatenate([jnp.ones((half,), f32), zeros_bn])
    bn_scale_full = jnp.concatenate([zeros_in, bn_scale_c])
    bn_shift_full = jnp.concatenate([zeros_in, bn_shift_c])
    in_w_full = jnp.concatenate([in_weight.astype(f32), zeros_bn])
    in_b_full = jnp.concatenate([in_bias.astype(f32), zeros_bn])

    def per_row(v):                                  # (C,) -> (N*C, 1), row r = n*C + c
        return jnp.tile(v, (N,)).reshape(NC, 1)

    # ---- row-tile sizing ----------------------------------------------------
    # Keep one (rt, HW) f32 tile <= ~4 MiB so x-in + out, each double-buffered,
    # stays well under the 32 MiB default scoped VMEM on every generation
    # (including v7x's 64 MiB physical VMEM).
    max_tile_bytes = 4 * 1024 * 1024
    rt = (max_tile_bytes // (HW * 4)) // 8 * 8
    rt = int(max(8, min(rt, 512)))
    rows_needed = ((NC + 7) // 8) * 8
    rt = min(rt, rows_needed)
    nc_pad = ((NC + rt - 1) // rt) * rt

    x2d = x.reshape(NC, HW)
    is_in_r = per_row(is_in_c)
    bn_scale_r = per_row(bn_scale_full)
    bn_shift_r = per_row(bn_shift_full)
    in_w_r = per_row(in_w_full)
    in_b_r = per_row(in_b_full)

    if nc_pad != NC:
        pad = ((0, nc_pad - NC), (0, 0))
        x2d = jnp.pad(x2d, pad)
        is_in_r = jnp.pad(is_in_r, pad)
        bn_scale_r = jnp.pad(bn_scale_r, pad)
        bn_shift_r = jnp.pad(bn_shift_r, pad)
        in_w_r = jnp.pad(in_w_r, pad)
        in_b_r = jnp.pad(in_b_r, pad)

    row_map = lambda i: (i, 0)
    itemsize = jnp.dtype(x.dtype).itemsize
    cost = pl.CostEstimate(
        flops=8 * nc_pad * HW,                 # mean, center, square, sum, FMA
        transcendentals=nc_pad,                # one rsqrt per row
        bytes_accessed=2 * itemsize * nc_pad * HW + 5 * 4 * nc_pad,
    )

    out2d = pl.pallas_call(
        functools.partial(_ibn_kernel, in_eps=in_eps),
        out_shape=jax.ShapeDtypeStruct((nc_pad, HW), x.dtype),
        grid=(nc_pad // rt,),
        in_specs=[
            pl.BlockSpec((rt, HW), row_map),   # x
            pl.BlockSpec((rt, 1), row_map),    # is_in mask
            pl.BlockSpec((rt, 1), row_map),    # bn scale
            pl.BlockSpec((rt, 1), row_map),    # bn shift
            pl.BlockSpec((rt, 1), row_map),    # IN affine weight
            pl.BlockSpec((rt, 1), row_map),    # IN affine bias
        ],
        out_specs=pl.BlockSpec((rt, HW), row_map),
        compiler_params=pltpu.CompilerParams(
            dimension_semantics=("parallel",)),   # shards rows across 2 TCs on v7x
        cost_estimate=cost,
    )(x2d, is_in_r, bn_scale_r, bn_shift_r, in_w_r, in_b_r)

    return out2d[:NC].reshape(N, C, H, W)


if __name__ == "__main__":
    planes = 4
    half = planes // 2
    N, C, H, W = 2, planes, 16, 16
    in_eps = 1e-5
    bn_eps = 1e-5

    key = jax.random.PRNGKey(0)
    kx, k1, k2, k3, k4, k5, k6 = jax.random.split(key, 7)

    x = jax.random.normal(kx, (N, C, H, W), dtype=jnp.float32)
    # InstanceNorm2d(half, affine=True): weight init 1, bias 0 — perturbed.
    in_weight = 1.0 + 0.1 * jax.random.normal(k1, (half,), jnp.float32)
    in_bias = 0.1 * jax.random.normal(k2, (half,), jnp.float32)
    # BN half (inference / running statistics), perturbed from identity.
    bn_weight = 1.0 + 0.1 * jax.random.normal(k3, (C - half,), jnp.float32)
    bn_bias = 0.1 * jax.random.normal(k4, (C - half,), jnp.float32)
    bn_mean = 0.1 * jax.random.normal(k5, (C - half,), jnp.float32)
    bn_var = 1.0 + 0.05 * jnp.abs(jax.random.normal(k6, (C - half,), jnp.float32))

    out = ibn_forward(x, in_weight, in_bias,
                      bn_weight, bn_bias, bn_mean, bn_var,
                      half=half, in_eps=in_eps, bn_eps=bn_eps)
    out = jax.block_until_ready(out)

    # Pure-JAX reference (IBN forward).
    x_in = x[:, :half]
    mu = x_in.mean(axis=(2, 3), keepdims=True)
    var = x_in.var(axis=(2, 3), keepdims=True)            # biased, like InstanceNorm
    ref_in = (x_in - mu) * lax.rsqrt(var + in_eps) * in_weight[None, :, None, None] \
        + in_bias[None, :, None, None]

    x_bn = x[:, half:]
    inv_std = lax.rsqrt(bn_var + bn_eps)
    ref_bn = (x_bn - bn_mean[None, :, None, None]) * (bn_weight * inv_std)[None, :, None, None] \
        + bn_bias[None, :, None, None]
    ref = jnp.concatenate([ref_in, ref_bn], axis=1)

    assert out.shape == x.shape and out.dtype == x.dtype
    assert jnp.allclose(out, ref, atol=1e-5, rtol=1e-5), \
        float(jnp.max(jnp.abs(out - ref)))

    print("KERNEL_OK")
</pallas_src>

<mosaic_0001>
module attributes {stable_mosaic.version = 11 : i64} {
  func.func @_ibn_kernel(%arg0: i32, %arg1: memref<8x256xf32, #tpu.memory_space<vmem>>, %arg2: memref<8x1xf32, #tpu.memory_space<vmem>>, %arg3: memref<8x1xf32, #tpu.memory_space<vmem>>, %arg4: memref<8x1xf32, #tpu.memory_space<vmem>>, %arg5: memref<8x1xf32, #tpu.memory_space<vmem>>, %arg6: memref<8x1xf32, #tpu.memory_space<vmem>>, %arg7: memref<8x256xf32, #tpu.memory_space<vmem>>) attributes {dimension_semantics = [#tpu.dimension_semantics<parallel>], iteration_bounds = array<i64: 1>, scalar_prefetch = 0 : i64, scratch_operands = 0 : i64, tpu.core_type = #tpu.core_type<tc>, window_params = [{transform_indices = @transform_0, window_bounds = array<i64: 8, 256>}, {transform_indices = @transform_1, window_bounds = array<i64: 8, 1>}, {transform_indices = @transform_2, window_bounds = array<i64: 8, 1>}, {transform_indices = @transform_3, window_bounds = array<i64: 8, 1>}, {transform_indices = @transform_4, window_bounds = array<i64: 8, 1>}, {transform_indices = @transform_5, window_bounds = array<i64: 8, 1>}, {transform_indices = @transform_6, window_bounds = array<i64: 8, 256>}]} {
    %c0 = arith.constant 0 : index
    %c0_0 = arith.constant 0 : index
    %0 = vector.load %arg1[%c0, %c0_0] : memref<8x256xf32, #tpu.memory_space<vmem>>, vector<8x256xf32>
    %cst = arith.constant dense<0.000000e+00> : vector<8xf32>
    %1 = vector.multi_reduction <add>, %0, %cst [1] : vector<8x256xf32> to vector<8xf32>
    %2 = vector.shape_cast %1 : vector<8xf32> to vector<8x1xf32>
    %cst_1 = arith.constant 3.906250e-03 : f32
    %3 = vector.broadcast %cst_1 : f32 to vector<8x1xf32>
    %4 = arith.mulf %2, %3 : vector<8x1xf32>
    %5 = vector.broadcast %4 : vector<8x1xf32> to vector<8x256xf32>
    %6 = arith.subf %0, %5 : vector<8x256xf32>
    %7 = arith.mulf %6, %6 : vector<8x256xf32>
    %cst_2 = arith.constant dense<0.000000e+00> : vector<8xf32>
    %8 = vector.multi_reduction <add>, %7, %cst_2 [1] : vector<8x256xf32> to vector<8xf32>
    %9 = vector.shape_cast %8 : vector<8xf32> to vector<8x1xf32>
    %cst_3 = arith.constant 3.906250e-03 : f32
    %10 = vector.broadcast %cst_3 : f32 to vector<8x1xf32>
    %11 = arith.mulf %9, %10 : vector<8x1xf32>
    %c0_4 = arith.constant 0 : index
    %c0_5 = arith.constant 0 : index
    %12 = vector.load %arg5[%c0_4, %c0_5] : memref<8x1xf32, #tpu.memory_space<vmem>>, vector<8x1xf32>
    %cst_6 = arith.constant 9.99999974E-6 : f32
    %13 = vector.broadcast %cst_6 : f32 to vector<8x1xf32>
    %14 = arith.addf %11, %13 : vector<8x1xf32>
    %15 = math.rsqrt %14 : vector<8x1xf32>
    %16 = arith.mulf %12, %15 : vector<8x1xf32>
    %c0_7 = arith.constant 0 : index
    %c0_8 = arith.constant 0 : index
    %17 = vector.load %arg6[%c0_7, %c0_8] : memref<8x1xf32, #tpu.memory_space<vmem>>, vector<8x1xf32>
    %18 = arith.mulf %4, %16 : vector<8x1xf32>
    %19 = arith.subf %17, %18 : vector<8x1xf32>
    %c0_9 = arith.constant 0 : index
    %c0_10 = arith.constant 0 : index
    %20 = vector.load %arg2[%c0_9, %c0_10] : memref<8x1xf32, #tpu.memory_space<vmem>>, vector<8x1xf32>
    %cst_11 = arith.constant 5.000000e-01 : f32
    %21 = vector.broadcast %cst_11 : f32 to vector<8x1xf32>
    %22 = arith.cmpf ogt, %20, %21 : vector<8x1xf32>
    %c0_12 = arith.constant 0 : index
    %c0_13 = arith.constant 0 : index
    %23 = vector.load %arg3[%c0_12, %c0_13] : memref<8x1xf32, #tpu.memory_space<vmem>>, vector<8x1xf32>
    %24 = arith.select %22, %16, %23 : vector<8x1xi1>, vector<8x1xf32>
    %c0_14 = arith.constant 0 : index
    %c0_15 = arith.constant 0 : index
    %25 = vector.load %arg4[%c0_14, %c0_15] : memref<8x1xf32, #tpu.memory_space<vmem>>, vector<8x1xf32>
    %26 = arith.select %22, %19, %25 : vector<8x1xi1>, vector<8x1xf32>
    %27 = vector.broadcast %24 : vector<8x1xf32> to vector<8x256xf32>
    %28 = arith.mulf %0, %27 : vector<8x256xf32>
    %29 = vector.broadcast %26 : vector<8x1xf32> to vector<8x256xf32>
    %30 = arith.addf %28, %29 : vector<8x256xf32>
    %c0_16 = arith.constant 0 : index
    %c0_17 = arith.constant 0 : index
    %31 = vector.load %arg7[%c0_16, %c0_17] : memref<8x256xf32, #tpu.memory_space<vmem>>, vector<8x256xf32>
    tpu.vector_store %arg7[%c0_16, %c0_17], %30 {strides = array<i32>} : memref<8x256xf32, #tpu.memory_space<vmem>>, vector<8x256xf32>,
    return
  }
  func.func @transform_0(%arg0: i32) -> (i32, i32) {
    %c0_i32 = arith.constant 0 : i32
    %c0_i32_0 = arith.constant 0 : i32
    return %arg0, %c0_i32 : i32, i32
  }
  func.func @transform_1(%arg0: i32) -> (i32, i32) {
    %c0_i32 = arith.constant 0 : i32
    %c0_i32_0 = arith.constant 0 : i32
    return %arg0, %c0_i32 : i32, i32
  }
  func.func @transform_2(%arg0: i32) -> (i32, i32) {
    %c0_i32 = arith.constant 0 : i32
    %c0_i32_0 = arith.constant 0 : i32
    return %arg0, %c0_i32 : i32, i32
  }
  func.func @transform_3(%arg0: i32) -> (i32, i32) {
    %c0_i32 = arith.constant 0 : i32
    %c0_i32_0 = arith.constant 0 : i32
    return %arg0, %c0_i32 : i32, i32
  }
  func.func @transform_4(%arg0: i32) -> (i32, i32) {
    %c0_i32 = arith.constant 0 : i32
    %c0_i32_0 = arith.constant 0 : i32
    return %arg0, %c0_i32 : i32, i32
  }
  func.func @transform_5(%arg0: i32) -> (i32, i32) {
    %c0_i32 = arith.constant 0 : i32
    %c0_i32_0 = arith.constant 0 : i32
    return %arg0, %c0_i32 : i32, i32
  }
  func.func @transform_6(%arg0: i32) -> (i32, i32) {
    %c0_i32 = arith.constant 0 : i32
    %c0_i32_0 = arith.constant 0 : i32
    return %arg0, %c0_i32 : i32, i32
  }
}

</mosaic_0001>

<llo_original>
// kernel: tpu_custom_call.1
$region0: #{tpu_custom_call.1}
  #allocation0 [shape = 'u32[]', space=smem, size = 0x4, offset = 0x4, fixed_abs, tag = 'smem constant byte address 0x4 - core index']
  #allocation1 [shape = 'u32[144,128]{1,0:T(1,128)}', space=vmem, size = 0x12000, scoped, tag = 'internal scratch']
  %s0 = inlined_call_operand.vmem [shape: f32[8,256], index: 0, kind: input, shape index: {}]
  %s1 = inlined_call_operand.vmem [shape: f32[8,1], index: 1, kind: input, shape index: {}]
  %s2 = inlined_call_operand.vmem [shape: f32[8,1], index: 2, kind: input, shape index: {}]
  %s3 = inlined_call_operand.vmem [shape: f32[8,1], index: 3, kind: input, shape index: {}]
  %s4 = inlined_call_operand.vmem [shape: f32[8,1], index: 4, kind: input, shape index: {}]
  %s5 = inlined_call_operand.vmem [shape: f32[8,1], index: 5, kind: input, shape index: {}]
  %s6 = inlined_call_operand.hbm [shape: f32[8,256], index: 6, kind: output, shape index: {}]
  %s7 = sld [smem:[#allocation0]]
  $region34: #{tpu_custom_call.1} parent=0
    _
  %s9 = ssub.s32 1, %s7
  %s10 = scalar_select 0, %s9, %s7
  $region1: #{tpu_custom_call.1} parent=0
    #allocation2 [shape = 'u8[8192]{0}', space=vmem, size = 0x2000, scoped, tag = 'output window, operand 0, single buffered']
    #allocation3 [shape = 's32[1]{0}', space=sflag, size = 0x4, scoped, tag = 'scoped memory for tpu_custom_call.1']
    %11 = vsyncpa [#allocation3], 0
    // Predicated region
    $region2: #{tpu_custom_call.1} parent=1 // pred_check
      _
    $region3: #{tpu_custom_call.1} parent=1 // pred_check_branch
      %13 = sbr.rel (0) target = $region5
    $region4: #{tpu_custom_call.1} parent=1 // pred_region
      _
    $region5: #{tpu_custom_call.1} parent=1 // pred_fallthru
      _
    // Predicated region
    $region6: #{tpu_custom_call.1} parent=1 // pred_check
      _
    $region7: #{tpu_custom_call.1} parent=1 // pred_check_branch
      %15 = sbr.rel (0) target = $region9
    $region8: #{tpu_custom_call.1} parent=1 // pred_region
      _
    $region9: #{tpu_custom_call.1} parent=1 // pred_fallthru
      _
    // Predicated region
    $region10: #{tpu_custom_call.1} parent=1 // pred_check
      _
    $region11: #{tpu_custom_call.1} parent=1 // pred_check_branch
      %17 = sbr.rel (0) target = $region13
    $region12: #{tpu_custom_call.1} parent=1 // pred_region
      _
    $region13: #{tpu_custom_call.1} parent=1 // pred_fallthru
      _
    // Predicated region
    $region14: #{tpu_custom_call.1} parent=1 // pred_check
      _
    $region15: #{tpu_custom_call.1} parent=1 // pred_check_branch
      %19 = sbr.rel (0) target = $region17
    $region16: #{tpu_custom_call.1} parent=1 // pred_region
      _
    $region17: #{tpu_custom_call.1} parent=1 // pred_fallthru
      _
    // Predicated region
    $region18: #{tpu_custom_call.1} parent=1 // pred_check
      _
    $region19: #{tpu_custom_call.1} parent=1 // pred_check_branch
      %21 = sbr.rel (0) target = $region21
    $region20: #{tpu_custom_call.1} parent=1 // pred_region
      _
    $region21: #{tpu_custom_call.1} parent=1 // pred_fallthru
      _
    // Predicated region
    $region22: #{tpu_custom_call.1} parent=1 // pred_check
      _
    $region23: #{tpu_custom_call.1} parent=1 // pred_check_branch
      %23 = sbr.rel (0) target = $region25
    $region24: #{tpu_custom_call.1} parent=1 // pred_region
      _
    $region25: #{tpu_custom_call.1} parent=1 // pred_fallthru
      _
    %v24 = vld [vmem:[%s0] sm:$0xff]
    %v25 = vld [vmem:[%s0 + $0x8] sm:$0xff]
    %v26 = vadd.f32 %v24, %v25
    %27 = vadd.xlane.f32.xlu0 %v26
    %v28 = vpop.xlane.xlu0 %27
    %v29 = vmul.f32 %v28, 0.00390625
    %v30 = vsub.f32 %v24, %v29
    %v31 = vsub.f32 %v25, %v29
    %v32 = vmul.f32 %v30, %v30
    %v33 = vmul.f32 %v31, %v31
    %v34 = vadd.f32 %v32, %v33
    %35 = vadd.xlane.f32.xlu0 %v34
    %v36 = vpop.xlane.xlu0 %35
    %v37 = vmul.f32 %v36, 0.00390625
    %v38 = vld [vmem:[%s4] sm:$0xff]
    %v39 = vadd.f32 %v37, 1e-05
    %v40 = vrsqrt.pop %v39
    %v41 = vmul.f32 %v38, %v40
    %v42 = vld [vmem:[%s5] sm:$0xff]
    %v43 = vmul.f32 %v29, %v41
    %v44 = vsub.f32 %v42, %v43
    %v45 = vld [vmem:[%s1] sm:$0xff]
    %vm46 = vcmp.gt.f32.partialorder %v45, 0.5
    %v47 = vld [vmem:[%s2] sm:$0xff]
    %v48 = vsel %vm46, %v41, %v47
    %v49 = vld [vmem:[%s3] sm:$0xff]
    %v50 = vsel %vm46, %v44, %v49
    %52 = vset.pattern.permute.xlu0 0
    %53 = vperm.xlu0 %52, %v48
    %v54 = vpop.permute.xlu0 %53
    %v56 = vmul.f32 %v24, %v54
    %v57 = vmul.f32 %v25, %v54
    %59 = vset.pattern.permute.xlu0 0
    %60 = vperm.xlu0 %59, %v50
    %v61 = vpop.permute.xlu0 %60
    %v63 = vadd.f32 %v56, %v61
    %v64 = vadd.f32 %v57, %v61
    %65 = vst [vmem:[#allocation2] sm:$0xff] %v63
    %66 = vst [vmem:[#allocation2 + $0x8] sm:$0xff] %v64
    // Predicated region
    $region26: #{tpu_custom_call.1} parent=1 // pred_check
      _
    $region27: #{tpu_custom_call.1} parent=1 // pred_check_branch
      %68 = sbr.rel (0) target = $region29
    $region28: #{tpu_custom_call.1} parent=1 // pred_region
      %s70 = ssub.s32 256, 256
      %71 = vsyncadd [#allocation3], %s70
      %s73 = sshll.u32 [#allocation2], 4
      %s74 = int_to_ptr.vmem [resolvable:$true] %s73
      %76 = dma.vmem_to_hbm [thread:$0]  %s74, 256, %s6, [#allocation3]
    $region29: #{tpu_custom_call.1} parent=1 // pred_fallthru
      _
    // Predicated region
    $region30: #{tpu_custom_call.1} parent=1 // pred_check
      _
    $region31: #{tpu_custom_call.1} parent=1 // pred_check_branch
      %78 = sbr.rel (0) target = $region33
    $region32: #{tpu_custom_call.1} parent=1 // pred_region
      %79 = dma.done [#allocation3], 256
    $region33: #{tpu_custom_call.1} parent=1 // pred_fallthru
      _
    %80 = vsyncpa [#allocation3], 1

</llo_original>
